<compile_context>
chip_gen: v6e
topology: v6e:2x2x1
jax: 0.10.0
libtpu: 0.0.40
codegen_flags: <defaults>
</compile_context>

<pallas_src>
import functools

import jax
import jax.numpy as jnp
from jax.experimental import pallas as pl
from jax.experimental.pallas import tpu as pltpu

_NORM_EPS = 1e-6
_NORM_CLIP = 1e-4

_VMEM_BUDGET = 16 * 1024 * 1024     # tile-sizing budget (fits every generation)
_VMEM_LIMIT = 32 * 1024 * 1024      # scoped VMEM limit (<= v7x physical / 2)


def _round_up(n, m):
    return ((n + m - 1) // m) * m


def _round_down(n, m):
    return (n // m) * m


# --------------------------- tiling / layout probes ------------------------- #

def _tiling(b, c, in_bytes_per_elem):
    """Batch tile: VMEM-budget aware, lane-friendly, >=2 steps when b allows."""
    c_eff = max(_round_up(c, 128), 128)                 # lane-padded VMEM width
    # 2x-buffered logits + targets streams (HBM dtype) + ~6 live f32 temporaries
    per_row = c_eff * (2 * in_bytes_per_elem + 6 * 4)
    tile_b = max(8, _round_down(_VMEM_BUDGET // per_row, 8))
    tile_b = min(tile_b, 4096)
    if tile_b >= 128:
        tile_b = _round_down(tile_b, 128)               # lane-dense row outputs
        tile_b = min(tile_b, max(128, _round_up(b, 128)))
        if b > 128:                                     # >=2 steps -> v7x megacore
            tile_b = min(tile_b, max(128, _round_down(-(-b // 2), 128)))
    if b <= tile_b:
        tile_b = b                                      # single full-dim tile
    num_tiles = -(-b // tile_b)
    return tile_b, num_tiles


_LANE_MAJOR_CACHE = {}


def _transpose_probe_kernel(x_ref, o_ref):
    o_ref[...] = jnp.transpose(x_ref[...])


def _lane_major_ok(tile_b):
    """Lane-dense row outputs need an in-kernel (tile_b,1)->(1,tile_b) relayout
    (sublanes -> lanes).  Probe it once per tile size; fall back to the masked
    column layout if Mosaic rejects it or produces wrong data."""
    if tile_b not in _LANE_MAJOR_CACHE:
        try:
            x = jnp.arange(tile_b, dtype=jnp.float32).reshape(tile_b, 1)
            y = pl.pallas_call(
                _transpose_probe_kernel,
                out_shape=jax.ShapeDtypeStruct((1, tile_b), jnp.float32),
            )(x)
            ok = bool(jnp.allclose(y[0, :], x[:, 0]))
        except Exception:       # LoweringException / unsupported relayout
            ok = False
        _LANE_MAJOR_CACHE[tile_b] = ok
    return _LANE_MAJOR_CACHE[tile_b]


def _store_rows(ref, col, lane_major):
    if lane_major:
        ref[...] = jnp.transpose(col)    # (tile_b,1) -> (1,tile_b), lane-dense
    else:
        ref[...] = col                   # (tile_b,1) column (masked stores)


# ----------------------------- Pallas kernels ------------------------------ #

def _ce_rows_kernel(out_ref, tgt_ref, ce_ref, *, lane_major):
    """Per-sample CE: ce[i] = -(log_softmax(x)[i] * t[i]).sum()."""
    x = out_ref[...].astype(jnp.float32)                 # (tile_b, C)
    t = tgt_ref[...].astype(jnp.float32)
    m = jnp.max(x, axis=1, keepdims=True)
    z = x - m
    s = jnp.sum(jnp.exp(z), axis=1, keepdims=True)
    log_sm = z - jnp.log(s)
    row_ce = -jnp.sum(log_sm * t, axis=1, keepdims=True)
    _store_rows(ce_ref, row_ce, lane_major)


def _boot_rows_kernel(scal_ref, out_ref, tgt_ref, table_ref, ce_ref, loss_ref, *,
                      num_bins, loss_bound, sv_type, lane_major):
    """Fused CE rows + loss normalization + beta lookup + DSB/DHB row loss."""
    x = out_ref[...].astype(jnp.float32)                 # (tile_b, C)
    t = tgt_ref[...].astype(jnp.float32)

    m = jnp.max(x, axis=1, keepdims=True)
    z = x - m
    e = jnp.exp(z)
    s = jnp.sum(e, axis=1, keepdims=True)
    log_sm = z - jnp.log(s)
    row_ce = -jnp.sum(log_sm * t, axis=1, keepdims=True)  # (tile_b, 1)

    # beta_model.loss_normalization(calculated=False): min/max scaling.
    mn = scal_ref[0]
    mx = scal_ref[1]
    norm = (row_ce - mn) / (mx - mn + _NORM_EPS)
    norm = jnp.clip(norm, _NORM_CLIP, 1.0 - _NORM_CLIP)

    # beta_model.check_lookup_table: bin the normalized loss, gather posterior
    # via a one-hot reduction over the lane-padded lookup table.
    idx = jnp.clip((norm * num_bins).astype(jnp.int32), 0, num_bins - 1)
    lane = jax.lax.broadcasted_iota(jnp.int32,
                                    (x.shape[0], table_ref.shape[1]), 1)
    onehot = (lane == idx).astype(jnp.float32)             # (tile_b, R_pad)
    beta = jnp.sum(onehot * table_ref[...], axis=1, keepdims=True)
    beta = jnp.clip(beta, loss_bound, 1.0 - loss_bound)

    if sv_type == "DSB":
        # -(log_sm * softmax).sum() == -(log_sm * e).sum() / s : softmax never
        # materialized; reciprocal (EUP, approx) only touches a (tile_b,1) col.
        boot = (-jnp.sum(log_sm * e, axis=1, keepdims=True)
                * pl.reciprocal(s, approx=True))
    else:  # "DHB": -log_sm[argmax(softmax)] == -max(log_sm)  (monotone softmax)
        boot = -jnp.max(log_sm, axis=1, keepdims=True)

    row_loss = beta * row_ce + (1.0 - beta) * boot
    _store_rows(ce_ref, row_ce, lane_major)
    _store_rows(loss_ref, row_loss, lane_major)


# ------------------------------- wrappers ---------------------------------- #

def _row_specs(tile_b, num_tiles, lane_major):
    p = num_tiles * tile_b
    if lane_major:
        shape = jax.ShapeDtypeStruct((1, p), jnp.float32)
        spec = pl.BlockSpec((1, tile_b), lambda i: (0, i))
    else:
        shape = jax.ShapeDtypeStruct((p, 1), jnp.float32)
        spec = pl.BlockSpec((tile_b, 1), lambda i: (i, 0))
    return shape, spec


def ce_loss(outputs, targets):
    """Warm-up branch: returns (loss_ce [B], loss_ce.sum()/B)."""
    b, c = outputs.shape
    in_bytes = outputs.dtype.itemsize + targets.dtype.itemsize
    tile_b, num_tiles = _tiling(b, c, in_bytes)
    lane_major = ((num_tiles == 1 or tile_b % 128 == 0)
                  and _lane_major_ok(tile_b))
    out_shape, out_spec = _row_specs(tile_b, num_tiles, lane_major)

    rows = pl.pallas_call(
        functools.partial(_ce_rows_kernel, lane_major=lane_major),
        out_shape=out_shape,
        grid=(num_tiles,),
        in_specs=[pl.BlockSpec((tile_b, c), lambda i: (i, 0)),   # logits (native dtype)
                  pl.BlockSpec((tile_b, c), lambda i: (i, 0))],  # targets
        out_specs=out_spec,
        compiler_params=pltpu.CompilerParams(
            dimension_semantics=("parallel",),
            vmem_limit_bytes=_VMEM_LIMIT),
        cost_estimate=pl.CostEstimate(
            flops=7 * b * c,
            transcendentals=b * c + b,
            bytes_accessed=b * c * in_bytes + 4 * b),
    )(outputs, targets)

    loss_ce = rows[0, :b] if lane_major else rows[:b, 0]
    return loss_ce, jnp.sum(loss_ce) / b


def bootstrapping_loss(outputs, targets, lookup, min_loss, max_loss,
                       loss_bound, sv_type):
    """epoch >= checkpoint branch: returns (loss_ce [B], bootstrapped loss)."""
    b, c = outputs.shape
    in_bytes = outputs.dtype.itemsize + targets.dtype.itemsize
    tile_b, num_tiles = _tiling(b, c, in_bytes)
    lane_major = ((num_tiles == 1 or tile_b % 128 == 0)
                  and _lane_major_ok(tile_b))
    out_shape, out_spec = _row_specs(tile_b, num_tiles, lane_major)

    num_bins = int(lookup.shape[0])
    r_pad = max(_round_up(num_bins, 128), 128)
    table = jnp.zeros((1, r_pad), jnp.float32).at[0, :num_bins].set(
        lookup.astype(jnp.float32))
    scalars = jnp.stack([jnp.asarray(min_loss, jnp.float32),
                         jnp.asarray(max_loss, jnp.float32)])

    kernel = functools.partial(_boot_rows_kernel, num_bins=num_bins,
                               loss_bound=float(loss_bound), sv_type=sv_type,
                               lane_major=lane_major)
    rows_ce, rows_loss = pl.pallas_call(
        kernel,
        out_shape=(out_shape, out_shape),
        grid=(num_tiles,),
        in_specs=[pl.BlockSpec(memory_space=pltpu.MemorySpace.SMEM),   # min/max
                  pl.BlockSpec((tile_b, c), lambda i: (i, 0)),         # logits
                  pl.BlockSpec((tile_b, c), lambda i: (i, 0)),         # targets
                  pl.BlockSpec((1, r_pad), lambda i: (0, 0))],         # lookup
        out_specs=(out_spec, out_spec),
        compiler_params=pltpu.CompilerParams(
            dimension_semantics=("parallel",),
            vmem_limit_bytes=_VMEM_LIMIT),
        cost_estimate=pl.CostEstimate(
            flops=12 * b * c,
            transcendentals=b * c + 2 * b,
            bytes_accessed=b * c * in_bytes + 8 * b + 4 * r_pad),
    )(scalars, outputs, targets, table)

    if lane_major:
        loss_ce, row_loss = rows_ce[0, :b], rows_loss[0, :b]
    else:
        loss_ce, row_loss = rows_ce[:b, 0], rows_loss[:b, 0]
    return loss_ce, jnp.sum(row_loss) / b


# ------------------------------- module port -------------------------------- #

class BetaLookupModel:
    """Functional stand-in for the BMM `beta_model`: a fitted posterior lookup
    table over `resolution` bins of the min-max-normalized per-sample loss."""
    # TODO(synk): exact loss_normalization / check_lookup_table /
    # expectation_maximization internals of the BMM beta_model are not in the
    # spec; the standard min-max normalization + posterior lookup-table
    # formulation is used and fused into the Pallas kernel.

    def __init__(self, lookup_table):
        self.lookup = jnp.asarray(lookup_table, jnp.float32)
        self.resolution = int(self.lookup.shape[0])


class DynamicBootstrapping:
    """Functional port of the PyTorch DynamicBootstrapping module."""

    def __init__(self, beta_model, loss_bound, checkpoint, sv_type, device=None):
        assert sv_type in ("DSB", "DHB")
        self.beta_model = beta_model
        self.loss_bound = float(loss_bound)
        self.checkpoint = checkpoint
        self.sv_type = sv_type
        self.device = device  # unused on TPU

    def forward(self, outputs, targets, epoch, max_loss_epoch, min_loss_epoch):
        # TODO(synk): a label-index (int32) fast path could drop the dense
        # targets stream entirely when targets are one-hot; dense targets are
        # kept because the spec allows soft labels.
        if epoch < self.checkpoint:
            return ce_loss(outputs, targets)
        return bootstrapping_loss(outputs, targets, self.beta_model.lookup,
                                  min_loss_epoch, max_loss_epoch,
                                  self.loss_bound, self.sv_type)

    __call__ = forward

    def update(self, loss_overall):
        # TODO(synk): the BMM expectation_maximization refit is host-side and
        # not part of the provided spec; only the epoch loss range required by
        # forward() is produced here.
        return jnp.max(loss_overall), jnp.min(loss_overall)


# ------------------------------- reference ---------------------------------- #

def _ref_forward(outputs, targets, epoch, max_loss, min_loss, lookup,
                 loss_bound, checkpoint, sv_type):
    log_sm = jax.nn.log_softmax(outputs, axis=1)
    b = outputs.shape[0]
    loss_ce = -(log_sm * targets).sum(axis=1)
    if epoch < checkpoint:
        return loss_ce, loss_ce.sum() / b
    r = lookup.shape[0]
    norm = (loss_ce - min_loss) / (max_loss - min_loss + _NORM_EPS)
    norm = jnp.clip(norm, _NORM_CLIP, 1.0 - _NORM_CLIP)
    idx = jnp.clip((norm * r).astype(jnp.int32), 0, r - 1)
    beta = jnp.clip(lookup[idx], loss_bound, 1.0 - loss_bound)[:, None]
    if sv_type == "DSB":
        pred = jax.nn.softmax(outputs, axis=1)
        loss = (-(beta * log_sm * targets).sum()
                - ((1.0 - beta) * log_sm * pred).sum()) / b
    else:
        hard = jnp.argmax(outputs, axis=1)[:, None]
        loss_hard = -jnp.take_along_axis(log_sm, hard, axis=1)
        loss = (-(beta * log_sm * targets).sum()
                + ((1.0 - beta) * loss_hard).sum()) / b
    return loss_ce, loss


if __name__ == "__main__":
    key = jax.random.PRNGKey(0)
    batch, num_classes = 8, 10
    resolution = 100
    loss_bound, checkpoint = 0.1, 1
    max_loss_epoch, min_loss_epoch = 4.0, 0.2

    k1, k2 = jax.random.split(key)
    outputs = jax.random.normal(k1, (batch, num_classes), dtype=jnp.float32)
    cls = jax.random.randint(k2, (batch,), 0, num_classes)
    targets = jax.nn.one_hot(cls, num_classes, dtype=jnp.float32)
    # smooth monotone posterior table (stand-in for the fitted BMM posterior)
    lookup = jax.nn.sigmoid(jnp.linspace(-4.0, 4.0, resolution)).astype(jnp.float32)

    beta_model = BetaLookupModel(lookup)

    for sv_type in ("DSB", "DHB"):
        dyn = DynamicBootstrapping(beta_model, loss_bound, checkpoint, sv_type)

        # warm-up epoch (plain per-sample CE, mean loss)
        loss_ce0, loss0 = dyn(outputs, targets, 0, max_loss_epoch, min_loss_epoch)
        jax.block_until_ready(loss0)
        ref_ce0, ref_l0 = _ref_forward(outputs, targets, 0, max_loss_epoch,
                                       min_loss_epoch, lookup, loss_bound,
                                       checkpoint, sv_type)
        assert jnp.allclose(loss_ce0, ref_ce0, atol=1e-5), (loss_ce0, ref_ce0)
        assert jnp.allclose(loss0, ref_l0, atol=1e-5), (loss0, ref_l0)

        # bootstrapping epoch (beta lookup + DSB/DHB weighted loss)
        loss_ce1, loss1 = dyn(outputs, targets, checkpoint,
                              max_loss_epoch, min_loss_epoch)
        jax.block_until_ready(loss1)
        ref_ce1, ref_l1 = _ref_forward(outputs, targets, checkpoint,
                                       max_loss_epoch, min_loss_epoch, lookup,
                                       loss_bound, checkpoint, sv_type)
        assert jnp.allclose(loss_ce1, ref_ce1, atol=1e-5), (loss_ce1, ref_ce1)
        # DSB uses the approx (EUP) reciprocal for the per-row softmax denom.
        tol = 2e-3 if sv_type == "DSB" else 1e-5
        assert jnp.allclose(loss1, ref_l1, atol=tol, rtol=tol), (loss1, ref_l1)

    print("KERNEL_OK")
</pallas_src>

<mosaic_0001>
module attributes {stable_mosaic.version = 11 : i64} {
  func.func @_transpose_probe_kernel(%arg0: memref<8x1xf32, #tpu.memory_space<vmem>>, %arg1: memref<1x8xf32, #tpu.memory_space<vmem>>) attributes {dimension_semantics = [], scalar_prefetch = 0 : i64, scratch_operands = 0 : i64, tpu.core_type = #tpu.core_type<tc>} {
    %c0 = arith.constant 0 : index
    %c0_0 = arith.constant 0 : index
    %0 = vector.load %arg0[%c0, %c0_0] : memref<8x1xf32, #tpu.memory_space<vmem>>, vector<8x1xf32>
    %1 = tpu.transpose %0, [1, 0] : vector<8x1xf32> -> vector<1x8xf32>
    %c0_1 = arith.constant 0 : index
    %c0_2 = arith.constant 0 : index
    %2 = vector.load %arg1[%c0_1, %c0_2] : memref<1x8xf32, #tpu.memory_space<vmem>>, vector<1x8xf32>
    tpu.vector_store %arg1[%c0_1, %c0_2], %1 {strides = array<i32>} : memref<1x8xf32, #tpu.memory_space<vmem>>, vector<1x8xf32>,
    return
  }
}

module attributes {stable_mosaic.version = 11 : i64} {
  func.func @_ce_rows_kernel(%arg0: i32, %arg1: memref<8x10xf32, #tpu.memory_space<vmem>>, %arg2: memref<8x10xf32, #tpu.memory_space<vmem>>, %arg3: memref<8x1xf32, #tpu.memory_space<vmem>>) attributes {dimension_semantics = [#tpu.dimension_semantics<parallel>], iteration_bounds = array<i64: 1>, scalar_prefetch = 0 : i64, scratch_operands = 0 : i64, tpu.core_type = #tpu.core_type<tc>, window_params = [{transform_indices = @transform_0, window_bounds = array<i64: 8, 10>}, {transform_indices = @transform_1, window_bounds = array<i64: 8, 10>}, {transform_indices = @transform_2, window_bounds = array<i64: 8, 1>}]} {
    %c0 = arith.constant 0 : index
    %c0_0 = arith.constant 0 : index
    %0 = vector.load %arg1[%c0, %c0_0] : memref<8x10xf32, #tpu.memory_space<vmem>>, vector<8x10xf32>
    %c0_1 = arith.constant 0 : index
    %c0_2 = arith.constant 0 : index
    %1 = vector.load %arg2[%c0_1, %c0_2] : memref<8x10xf32, #tpu.memory_space<vmem>>, vector<8x10xf32>
    %cst = arith.constant dense<0xFF800000> : vector<8xf32>
    %2 = vector.multi_reduction <maximumf>, %0, %cst [1] : vector<8x10xf32> to vector<8xf32>
    %3 = vector.shape_cast %2 : vector<8xf32> to vector<8x1xf32>
    %4 = vector.broadcast %3 : vector<8x1xf32> to vector<8x10xf32>
    %5 = arith.subf %0, %4 : vector<8x10xf32>
    %6 = math.exp %5 : vector<8x10xf32>
    %cst_3 = arith.constant dense<0.000000e+00> : vector<8xf32>
    %7 = vector.multi_reduction <add>, %6, %cst_3 [1] : vector<8x10xf32> to vector<8xf32>
    %8 = vector.shape_cast %7 : vector<8xf32> to vector<8x1xf32>
    %9 = math.log %8 : vector<8x1xf32>
    %10 = vector.broadcast %9 : vector<8x1xf32> to vector<8x10xf32>
    %11 = arith.subf %5, %10 : vector<8x10xf32>
    %12 = arith.mulf %11, %1 : vector<8x10xf32>
    %cst_4 = arith.constant dense<0.000000e+00> : vector<8xf32>
    %13 = vector.multi_reduction <add>, %12, %cst_4 [1] : vector<8x10xf32> to vector<8xf32>
    %14 = vector.shape_cast %13 : vector<8xf32> to vector<8x1xf32>
    %cst_5 = arith.constant 0.000000e+00 : f32
    %15 = vector.broadcast %cst_5 : f32 to vector<8x1xf32>
    %16 = arith.subf %15, %14 : vector<8x1xf32>
    %c0_6 = arith.constant 0 : index
    %c0_7 = arith.constant 0 : index
    %17 = vector.load %arg3[%c0_6, %c0_7] : memref<8x1xf32, #tpu.memory_space<vmem>>, vector<8x1xf32>
    tpu.vector_store %arg3[%c0_6, %c0_7], %16 {strides = array<i32>} : memref<8x1xf32, #tpu.memory_space<vmem>>, vector<8x1xf32>,
    return
  }
  func.func @transform_0(%arg0: i32) -> (i32, i32) {
    %c0_i32 = arith.constant 0 : i32
    %c0_i32_0 = arith.constant 0 : i32
    return %arg0, %c0_i32 : i32, i32
  }
  func.func @transform_1(%arg0: i32) -> (i32, i32) {
    %c0_i32 = arith.constant 0 : i32
    %c0_i32_0 = arith.constant 0 : i32
    return %arg0, %c0_i32 : i32, i32
  }
  func.func @transform_2(%arg0: i32) -> (i32, i32) {
    %c0_i32 = arith.constant 0 : i32
    %c0_i32_0 = arith.constant 0 : i32
    return %arg0, %c0_i32 : i32, i32
  }
}

</mosaic_0001>

<llo_original>
// kernel: tpu_custom_call.1
$region0: #{tpu_custom_call.1}
  #allocation0 [shape = 'u32[]', space=smem, size = 0x4, offset = 0x4, fixed_abs, tag = 'smem constant byte address 0x4 - core index']
  #allocation1 [shape = 'u32[144,128]{1,0:T(1,128)}', space=vmem, size = 0x12000, scoped, tag = 'internal scratch']
  %s0 = inlined_call_operand.vmem [shape: f32[8,1], index: 0, kind: input, shape index: {}]
  %s1 = inlined_call_operand.hbm [shape: f32[1,8], index: 1, kind: output, shape index: {}]
  %s2 = sld [smem:[#allocation0]]
  $region14: #{tpu_custom_call.1} parent=0
    _
  %s4 = ssub.s32 1, %s2
  %s5 = scalar_select 0, %s4, %s2
  $region1: #{tpu_custom_call.1} parent=0
    #allocation2 [shape = 'u8[512]{0}', space=vmem, size = 0x400, scoped, tag = 'output window, operand 0, single buffered']
    #allocation3 [shape = 's32[1]{0}', space=sflag, size = 0x4, scoped, tag = 'scoped memory for tpu_custom_call.1']
    %6 = vsyncpa [#allocation3], 0
    // Predicated region
    $region2: #{tpu_custom_call.1} parent=1 // pred_check
      _
    $region3: #{tpu_custom_call.1} parent=1 // pred_check_branch
      %8 = sbr.rel (0) target = $region5
    $region4: #{tpu_custom_call.1} parent=1 // pred_region
      _
    $region5: #{tpu_custom_call.1} parent=1 // pred_fallthru
      _
    %v9 = vld [vmem:[%s0] sm:$0xff]
    %10 = vxpose.xlu0.b32.start [1/16] %v9, 128
    %11 = vxpose.xlu0.b32.cont [2/16] 0.0, 128
    %12 = vxpose.xlu0.b32.cont [3/16] 0.0, 128
    %13 = vxpose.xlu0.b32.cont [4/16] 0.0, 128
    %14 = vxpose.xlu0.b32.cont [5/16] 0.0, 128
    %15 = vxpose.xlu0.b32.cont [6/16] 0.0, 128
    %16 = vxpose.xlu0.b32.cont [7/16] 0.0, 128
    %17 = vxpose.xlu0.b32.cont [8/16] 0.0, 128
    %18 = vxpose.xlu0.b32.cont [9/16] 0.0, 128
    %19 = vxpose.xlu0.b32.cont [10/16] 0.0, 128
    %20 = vxpose.xlu0.b32.cont [11/16] 0.0, 128
    %21 = vxpose.xlu0.b32.cont [12/16] 0.0, 128
    %22 = vxpose.xlu0.b32.cont [13/16] 0.0, 128
    %23 = vxpose.xlu0.b32.cont [14/16] 0.0, 128
    %24 = vxpose.xlu0.b32.cont [15/16] 0.0, 128
    %25 = vxpose.xlu0.b32.end [16/16] 0.0, 128
    %v26 = vpop.trf.xlu0
    %v27 = vpop.trf.xlu0
    %v28 = vpop.trf.xlu0
    %v29 = vpop.trf.xlu0
    %v30 = vpop.trf.xlu0
    %v31 = vpop.trf.xlu0
    %v32 = vpop.trf.xlu0
    %v33 = vpop.trf.xlu0
    %v34 = vpop.trf.xlu0
    %v35 = vpop.trf.xlu0
    %v36 = vpop.trf.xlu0
    %v37 = vpop.trf.xlu0
    %v38 = vpop.trf.xlu0
    %v39 = vpop.trf.xlu0
    %v40 = vpop.trf.xlu0
    %v41 = vpop.trf.xlu0
    %vm42 = vcmask 57344
    %43 = vst.msk [vmem:[#allocation2] sm:$0x1] %vm42, %v26
    // Predicated region
    $region6: #{tpu_custom_call.1} parent=1 // pred_check
      _
    $region7: #{tpu_custom_call.1} parent=1 // pred_check_branch
      %45 = sbr.rel (0) target = $region9
    $region8: #{tpu_custom_call.1} parent=1 // pred_region
      %s47 = ssub.s32 16, 16
      %48 = vsyncadd [#allocation3], %s47
      %s50 = sshll.u32 [#allocation2], 4
      %s51 = int_to_ptr.vmem [resolvable:$true] %s50
      %53 = dma.vmem_to_hbm [thread:$0]  %s51, 16, %s1, [#allocation3]
    $region9: #{tpu_custom_call.1} parent=1 // pred_fallthru
      _
    // Predicated region
    $region10: #{tpu_custom_call.1} parent=1 // pred_check
      _
    $region11: #{tpu_custom_call.1} parent=1 // pred_check_branch
      %55 = sbr.rel (0) target = $region13
    $region12: #{tpu_custom_call.1} parent=1 // pred_region
      %56 = dma.done [#allocation3], 16
    $region13: #{tpu_custom_call.1} parent=1 // pred_fallthru
      _
    %57 = vsyncpa [#allocation3], 1

// kernel: tpu_custom_call.1
$region0: #{tpu_custom_call.1}
  #allocation0 [shape = 'u32[]', space=smem, size = 0x4, offset = 0x4, fixed_abs, tag = 'smem constant byte address 0x4 - core index']
  #allocation1 [shape = 'u32[144,128]{1,0:T(1,128)}', space=vmem, size = 0x12000, scoped, tag = 'internal scratch']
  %s0 = inlined_call_operand.hbm [shape: f32[8,10], index: 0, kind: input, shape index: {}]
  %s1 = inlined_call_operand.hbm [shape: f32[8,10], index: 1, kind: input, shape index: {}]
  %s2 = inlined_call_operand.vmem [shape: f32[8,1], index: 2, kind: output, shape index: {}]
  %s3 = sld [smem:[#allocation0]]
  $region26: #{tpu_custom_call.1} parent=0
    _
  %s5 = ssub.s32 1, %s3
  %s6 = scalar_select 0, %s5, %s3
  $region1: #{tpu_custom_call.1} parent=0
    #allocation2 [shape = 'u8[4096]{0}', space=vmem, size = 0x1000, scoped, tag = 'input window, operand 0, single buffered']
    #allocation3 [shape = 's32[1]{0}', space=sflag, size = 0x4, scoped, tag = 'scoped memory for tpu_custom_call.1']
    #allocation4 [shape = 'u8[4096]{0}', space=vmem, size = 0x1000, scoped, tag = 'input window, operand 1, single buffered']
    #allocation5 [shape = 's32[1]{0}', space=sflag, size = 0x4, scoped, tag = 'scoped memory for tpu_custom_call.1']
    %7 = vsyncpa [#allocation3], 0
    %8 = vsyncpa [#allocation5], 0
    // Predicated region
    $region2: #{tpu_custom_call.1} parent=1 // pred_check
      _
    $region3: #{tpu_custom_call.1} parent=1 // pred_check_branch
      %10 = sbr.rel (0) target = $region5
    $region4: #{tpu_custom_call.1} parent=1 // pred_region
      %s12 = ssub.s32 128, 128
      %13 = vsyncadd [#allocation3], %s12
      %s15 = sshll.u32 [#allocation2], 4
      %s16 = int_to_ptr.vmem [resolvable:$true] %s15
      %18 = dma.hbm_to_vmem [thread:$0]  %s0, 128, %s16, [#allocation3]
    $region5: #{tpu_custom_call.1} parent=1 // pred_fallthru
      _
    // Predicated region
    $region6: #{tpu_custom_call.1} parent=1 // pred_check
      _
    $region7: #{tpu_custom_call.1} parent=1 // pred_check_branch
      %20 = sbr.rel (0) target = $region9
    $region8: #{tpu_custom_call.1} parent=1 // pred_region
      %s22 = ssub.s32 128, 128
      %23 = vsyncadd [#allocation5], %s22
      %s25 = sshll.u32 [#allocation4], 4
      %s26 = int_to_ptr.vmem [resolvable:$true] %s25
      %28 = dma.hbm_to_vmem [thread:$0]  %s1, 128, %s26, [#allocation5]
    $region9: #{tpu_custom_call.1} parent=1 // pred_fallthru
      _
    // Predicated region
    $region10: #{tpu_custom_call.1} parent=1 // pred_check
      _
    $region11: #{tpu_custom_call.1} parent=1 // pred_check_branch
      %30 = sbr.rel (0) target = $region13
    $region12: #{tpu_custom_call.1} parent=1 // pred_region
      %31 = dma.done [#allocation3], 128
    $region13: #{tpu_custom_call.1} parent=1 // pred_fallthru
      _
    // Predicated region
    $region14: #{tpu_custom_call.1} parent=1 // pred_check
      _
    $region15: #{tpu_custom_call.1} parent=1 // pred_check_branch
      %33 = sbr.rel (0) target = $region17
    $region16: #{tpu_custom_call.1} parent=1 // pred_region
      %34 = dma.done [#allocation5], 128
    $region17: #{tpu_custom_call.1} parent=1 // pred_fallthru
      _
    %v35 = vld [vmem:[#allocation2] sm:$0xff]
    %v36 = vld [vmem:[#allocation4] sm:$0xff]
    %vm37 = vcmask 80896
    %v38 = vsel %vm37, %v35, -inf
    %39 = vmax.xlane.f32.xlu0 %v38
    %v40 = vpop.xlane.xlu0 %39
    %v41 = vsub.f32 %v35, %v40
    %v42 = vmul.f32 %v41, 1.442695
    %v43 = vpow.pop %v42
    %v44 = vsel %vm37, %v43, 0.0
    %45 = vadd.xlane.f32.xlu0 %v44
    %v46 = vpop.xlane.xlu0 %45
    %v47 = vlog2.pop %v46
    %v48 = vmul.f32 %v47, 0.6931472
    %v49 = vsub.f32 %v41, %v48
    %v50 = vmul.f32 %v49, %v36
    %v51 = vsel %vm37, %v50, 0.0
    %52 = vadd.xlane.f32.xlu0 %v51
    %v53 = vpop.xlane.xlu0 %52
    %v54 = vsub.f32 0.0, %v53
    %vm55 = vcmask 7168
    %56 = vst.msk [vmem:[%s2] sm:$0xff] %vm55, %v54
    // Predicated region
    $region18: #{tpu_custom_call.1} parent=1 // pred_check
      _
    $region19: #{tpu_custom_call.1} parent=1 // pred_check_branch
      %58 = sbr.rel (0) target = $region21
    $region20: #{tpu_custom_call.1} parent=1 // pred_region
      _
    $region21: #{tpu_custom_call.1} parent=1 // pred_fallthru
      _
    // Predicated region
    $region22: #{tpu_custom_call.1} parent=1 // pred_check
      _
    $region23: #{tpu_custom_call.1} parent=1 // pred_check_branch
      %60 = sbr.rel (0) target = $region25
    $region24: #{tpu_custom_call.1} parent=1 // pred_region
      _
    $region25: #{tpu_custom_call.1} parent=1 // pred_fallthru
      _
    %61 = vsyncpa [#allocation3], 1
    %62 = vsyncpa [#allocation5], 1

</llo_original>
